<compile_context>
chip_gen: v7x
topology: tpu7x:2x2x1
jax: 0.10.0
libtpu: 0.0.40
codegen_flags: <defaults>
</compile_context>

<pallas_src>
import jax
import jax.numpy as jnp
from jax.experimental import pallas as pl
from jax.experimental.pallas import tpu as pltpu


def _round_up(x, m):
    return (x + m - 1) // m * m


def _vmem_limit_bytes():
    """Generation-aware scoped-VMEM request (conservative fallback)."""
    try:
        kind = jax.devices()[0].device_kind.lower()
    except Exception:
        kind = ""
    if "v7" in kind or "7x" in kind:
        return 56 * 1024 * 1024        # v7x: 64 MiB physical -> leave headroom
    if "v5" in kind or "v6" in kind:
        return 100 * 1024 * 1024       # v5e/v6e: 128 MiB physical
    return 48 * 1024 * 1024            # unknown chip / interpreter: safe default


# ----------------------------------------------------------------------------
# Pallas kernels
# ----------------------------------------------------------------------------
def _conv_stats_kernel(x_ref, w_ref, sum_ref, ssq_ref):
    """Pass 1: per-channel sum / sum-of-squares of the 1x1-conv outputs.

    Grid is (2, n_half): leading "parallel" axis = core split (each core owns its
    own 8-row slab of the (16, Cp) partial outputs), inner "arbitrary" axis = M
    tiles accumulated into the VMEM-resident slab.
    x_ref:(tm, Cin)  w_ref:(Cin, Cp)  sum_ref/ssq_ref:(8, Cp) (row 0 used).
    """
    @pl.when(pl.program_id(1) == 0)
    def _():
        sum_ref[...] = jnp.zeros_like(sum_ref)
        ssq_ref[...] = jnp.zeros_like(ssq_ref)

    acc = jnp.dot(x_ref[...], w_ref[...], preferred_element_type=jnp.float32)
    sum_ref[0:1, :] += jnp.sum(acc, axis=0, keepdims=True)
    ssq_ref[0:1, :] += jnp.sum(acc * acc, axis=0, keepdims=True)


def _conv_bn_apply_kernel(x_ref, w_ref, scale_ref, shift_ref, o_ref):
    """Pass 2: recompute the 1x1 conv matmul and apply folded BN scale/shift."""
    acc = jnp.dot(x_ref[...], w_ref[...], preferred_element_type=jnp.float32)
    o_ref[...] = (acc * scale_ref[...] + shift_ref[...]).astype(o_ref.dtype)


# ----------------------------------------------------------------------------
# Wrapper
# ----------------------------------------------------------------------------
def resnext_residual_forward(x_nchw, weight, gamma, beta, *, stride=2, eps=1e-5,
                             tile_m=1024, matmul_dtype=jnp.bfloat16):
    """Forward of ResNextResidual.

    x_nchw:  (N, Cin, H, W) float32 (PyTorch NCHW convention)
    weight:  (Cout, Cin, 1, 1) — Conv2d(kernel_size=1, stride=stride, bias=False)
    gamma/beta: (Cout,) — BatchNorm2d affine parameters
    Returns (N, Cout, OH, OW) float32.
    """
    N, Cin, H, W = x_nchw.shape
    Cout = weight.shape[0]

    # 1x1 conv with stride s, no padding == strided spatial subsample + matmul.
    # Subsample BEFORE the layout transpose (stride^2 less data to move).
    x = x_nchw[:, :, ::stride, ::stride].astype(matmul_dtype)       # (N, Cin, OH, OW)
    OH, OW = x.shape[2], x.shape[3]
    M = N * OH * OW
    x_mat = jnp.transpose(x, (0, 2, 3, 1)).reshape(M, Cin)

    # Weight -> (Cin, Cout), lane-dense padding of the channel (lane) dim to 128k.
    Cp = _round_up(Cout, 128)
    w_mat = jnp.transpose(weight.reshape(Cout, Cin).astype(jnp.float32), (1, 0))
    if Cp != Cout:
        w_mat = jnp.pad(w_mat, ((0, 0), (0, Cp - Cout)))
    w_mat = w_mat.astype(matmul_dtype)
    g = jnp.pad(gamma.astype(jnp.float32), (0, Cp - Cout))
    b = jnp.pad(beta.astype(jnp.float32), (0, Cp - Cout))

    # --- generation-aware VMEM budget and M-tile size ---------------------------
    itemsize = int(jnp.dtype(matmul_dtype).itemsize)
    vmem_limit = _vmem_limit_bytes()
    sub = 8 if itemsize >= 4 else (16 if itemsize == 2 else 32)      # sublane tiling
    budget = int(vmem_limit * 0.7)
    fixed = 2 * Cin * Cp * itemsize + 8 * 8 * Cp * 4                  # weight + stats blocks
    per_row = 2 * Cin * itemsize + 2 * Cp * 4                         # x + f32 out (2-buffered)
    tm_cap = max(sub, (budget - fixed) // per_row)
    half = _round_up(max((M + 1) // 2, 1), sub)                       # each core >= one tile
    tm = min(int(tile_m), int(tm_cap), half)
    tm = max(sub, (tm // sub) * sub)

    # Zero row padding contributes nothing to the statistics (0 @ W = 0).
    Mp = _round_up(M, 2 * tm)
    if Mp != M:
        x_mat = jnp.pad(x_mat, ((0, Mp - M), (0, 0)))
    n_tiles = Mp // tm
    n_half = n_tiles // 2

    # --- Pass 1: per-channel sum / sum-of-squares (2-way core split) -----------
    sum_parts, ssq_parts = pl.pallas_call(
        _conv_stats_kernel,
        out_shape=(
            jax.ShapeDtypeStruct((16, Cp), jnp.float32),
            jax.ShapeDtypeStruct((16, Cp), jnp.float32),
        ),
        grid=(2, n_half),
        in_specs=[
            pl.BlockSpec((tm, Cin), lambda c, i: (c * n_half + i, 0)),
            pl.BlockSpec((Cin, Cp), lambda c, i: (0, 0)),
        ],
        out_specs=(
            pl.BlockSpec((8, Cp), lambda c, i: (c, 0)),   # per-core resident slab
            pl.BlockSpec((8, Cp), lambda c, i: (c, 0)),
        ),
        compiler_params=pltpu.CompilerParams(
            dimension_semantics=("parallel", "arbitrary"),
            vmem_limit_bytes=vmem_limit,
        ),
        cost_estimate=pl.CostEstimate(
            flops=2 * Mp * Cin * Cp,
            transcendentals=0,
            bytes_accessed=Mp * Cin * itemsize + Cin * Cp * itemsize + 2 * 16 * Cp * 4,
        ),
    )(x_mat, w_mat)

    # --- Fold BN statistics into per-channel scale/shift (tiny (Cp,) math) -----
    count = jnp.float32(M)
    ch_sum = jnp.sum(sum_parts, axis=0)                  # (Cp,)
    ch_ssq = jnp.sum(ssq_parts, axis=0)
    mean = ch_sum / count
    var = jnp.maximum(ch_ssq / count - mean * mean, 0.0)  # biased variance (train mode)
    inv_std = jax.lax.rsqrt(var + eps)
    scale = (g * inv_std).reshape(1, Cp)
    shift = (b - mean * g * inv_std).reshape(1, Cp)

    # --- Pass 2: recompute conv matmul + fused normalize (fully parallel) ------
    out = pl.pallas_call(
        _conv_bn_apply_kernel,
        out_shape=jax.ShapeDtypeStruct((Mp, Cp), jnp.float32),
        grid=(n_tiles,),
        in_specs=[
            pl.BlockSpec((tm, Cin), lambda i: (i, 0)),
            pl.BlockSpec((Cin, Cp), lambda i: (0, 0)),
            pl.BlockSpec((1, Cp), lambda i: (0, 0)),
            pl.BlockSpec((1, Cp), lambda i: (0, 0)),
        ],
        out_specs=pl.BlockSpec((tm, Cp), lambda i: (i, 0)),
        compiler_params=pltpu.CompilerParams(
            dimension_semantics=("parallel",),
            vmem_limit_bytes=vmem_limit,
        ),
        cost_estimate=pl.CostEstimate(
            flops=2 * Mp * Cin * Cp + 2 * Mp * Cp,
            transcendentals=0,
            bytes_accessed=(Mp * Cin * itemsize + Cin * Cp * itemsize
                            + 2 * Cp * 4 + Mp * Cp * 4),
        ),
    )(x_mat, w_mat, scale, shift)

    out = out[:M, :Cout].reshape(N, OH, OW, Cout)
    return jnp.transpose(out, (0, 3, 1, 2))               # back to NCHW


# ----------------------------------------------------------------------------
# Pure-JAX reference (for correctness check)
# ----------------------------------------------------------------------------
def _reference(x_nchw, weight, gamma, beta, *, stride=2, eps=1e-5,
               matmul_dtype=jnp.float32):
    x = x_nchw[:, :, ::stride, ::stride]
    x = jnp.transpose(x, (0, 2, 3, 1))
    N, OH, OW, Cin = x.shape
    Cout = weight.shape[0]
    w = jnp.transpose(weight.reshape(Cout, Cin), (1, 0))
    y = jnp.dot(x.reshape(-1, Cin).astype(matmul_dtype), w.astype(matmul_dtype),
                preferred_element_type=jnp.float32)        # (M, Cout)
    mean = jnp.mean(y, axis=0, keepdims=True)
    var = jnp.mean(jnp.square(y - mean), axis=0, keepdims=True)   # biased (train mode)
    y = (y - mean) * jax.lax.rsqrt(var + eps) * gamma + beta
    return jnp.transpose(y.reshape(N, OH, OW, Cout), (0, 3, 1, 2))


# ----------------------------------------------------------------------------
if __name__ == "__main__":
    key = jax.random.PRNGKey(0)
    kx, kw = jax.random.split(key)

    N, Cin, H, W = 2, 32, 16, 16
    Cout, stride = 64, 2

    x = jax.random.normal(kx, (N, Cin, H, W), jnp.float32)
    bound = 1.0 / (Cin ** 0.5)                           # PyTorch Conv2d default init
    weight = jax.random.uniform(kw, (Cout, Cin, 1, 1), jnp.float32, -bound, bound)
    gamma = jnp.ones((Cout,), jnp.float32)
    beta = jnp.zeros((Cout,), jnp.float32)

    # tile_m=32 so the small example exercises multi-tile stats accumulation and
    # the 2-way core split (grid (2, 2)).
    out = resnext_residual_forward(x, weight, gamma, beta, stride=stride, tile_m=32)
    out = jax.block_until_ready(out)

    OH = (H - 1) // stride + 1
    OW = (W - 1) // stride + 1
    assert out.shape == (N, Cout, OH, OW), out.shape
    assert bool(jnp.all(jnp.isfinite(out)))

    # Reference uses the same bf16-cast matmul inputs (f32 accumulation) as the
    # kernel default; tolerance covers the remaining stats-formula differences.
    ref = _reference(x, weight, gamma, beta, stride=stride, matmul_dtype=jnp.bfloat16)
    assert jnp.allclose(out, ref, rtol=2e-2, atol=2e-2), float(jnp.max(jnp.abs(out - ref)))

    print("KERNEL_OK")
</pallas_src>

<mosaic_0001>
module attributes {stable_mosaic.version = 11 : i64} {
  func.func @_conv_stats_kernel(%arg0: i32, %arg1: i32, %arg2: memref<32x32xbf16, #tpu.memory_space<vmem>>, %arg3: memref<32x128xbf16, #tpu.memory_space<vmem>>, %arg4: memref<8x128xf32, #tpu.memory_space<vmem>>, %arg5: memref<8x128xf32, #tpu.memory_space<vmem>>) attributes {dimension_semantics = [#tpu.dimension_semantics<parallel>, #tpu.dimension_semantics<arbitrary>], iteration_bounds = array<i64: 2, 2>, scalar_prefetch = 0 : i64, scratch_operands = 0 : i64, tpu.core_type = #tpu.core_type<tc>, window_params = [{transform_indices = @transform_0, window_bounds = array<i64: 32, 32>}, {pipeline_mode = #tpu.pipeline_mode<synchronous>, transform_indices = @transform_1, window_bounds = array<i64: 32, 128>}, {transform_indices = @transform_2, window_bounds = array<i64: 8, 128>}, {transform_indices = @transform_3, window_bounds = array<i64: 8, 128>}]} {
    %c0_i32 = arith.constant 0 : i32
    %0 = arith.cmpi eq, %arg1, %c0_i32 : i32
    %1 = arith.extui %0 : i1 to i32
    %c0_i32_0 = arith.constant 0 : i32
    %2 = arith.cmpi ne, %1, %c0_i32_0 : i32
    scf.if %2 {
      %cst_14 = arith.constant 0.000000e+00 : f32
      %17 = vector.broadcast %cst_14 : f32 to vector<8x128xf32>
      %c0_15 = arith.constant 0 : index
      %c0_16 = arith.constant 0 : index
      %18 = vector.load %arg4[%c0_15, %c0_16] : memref<8x128xf32, #tpu.memory_space<vmem>>, vector<8x128xf32>
      tpu.vector_store %arg4[%c0_15, %c0_16], %17 {strides = array<i32>} : memref<8x128xf32, #tpu.memory_space<vmem>>, vector<8x128xf32>,
      %cst_17 = arith.constant 0.000000e+00 : f32
      %19 = vector.broadcast %cst_17 : f32 to vector<8x128xf32>
      %c0_18 = arith.constant 0 : index
      %c0_19 = arith.constant 0 : index
      %20 = vector.load %arg5[%c0_18, %c0_19] : memref<8x128xf32, #tpu.memory_space<vmem>>, vector<8x128xf32>
      tpu.vector_store %arg5[%c0_18, %c0_19], %19 {strides = array<i32>} : memref<8x128xf32, #tpu.memory_space<vmem>>, vector<8x128xf32>,
    } else {
    }
    %c0 = arith.constant 0 : index
    %c0_1 = arith.constant 0 : index
    %3 = vector.load %arg2[%c0, %c0_1] : memref<32x32xbf16, #tpu.memory_space<vmem>>, vector<32x32xbf16>
    %c0_2 = arith.constant 0 : index
    %c0_3 = arith.constant 0 : index
    %4 = vector.load %arg3[%c0_2, %c0_3] : memref<32x128xbf16, #tpu.memory_space<vmem>>, vector<32x128xbf16>
    %cst = arith.constant dense<0.000000e+00> : vector<32x128xf32>
    %5 = tpu.matmul %3, %4, %cst {dimension_numbers = #tpu.dot_dimension_numbers<[1], [0], [0], [1], [0, 0, 1, 1], [], []>} : vector<32x32xbf16>, vector<32x128xbf16>, vector<32x128xf32> -> vector<32x128xf32>
    %c0_4 = arith.constant 0 : index
    %c0_5 = arith.constant 0 : index
    %6 = vector.load %arg4[%c0_4, %c0_5] : memref<8x128xf32, #tpu.memory_space<vmem>>, vector<1x128xf32>
    %cst_6 = arith.constant dense<0.000000e+00> : vector<128xf32>
    %7 = vector.multi_reduction <add>, %5, %cst_6 [0] : vector<32x128xf32> to vector<128xf32>
    %8 = vector.shape_cast %7 : vector<128xf32> to vector<1x128xf32>
    %9 = arith.addf %6, %8 : vector<1x128xf32>
    %c0_7 = arith.constant 0 : index
    %c0_8 = arith.constant 0 : index
    %10 = vector.load %arg4[%c0_7, %c0_8] : memref<8x128xf32, #tpu.memory_space<vmem>>, vector<1x128xf32>
    tpu.vector_store %arg4[%c0_7, %c0_8], %9 {strides = array<i32>} : memref<8x128xf32, #tpu.memory_space<vmem>>, vector<1x128xf32>,
    %c0_9 = arith.constant 0 : index
    %c0_10 = arith.constant 0 : index
    %11 = vector.load %arg5[%c0_9, %c0_10] : memref<8x128xf32, #tpu.memory_space<vmem>>, vector<1x128xf32>
    %12 = arith.mulf %5, %5 : vector<32x128xf32>
    %cst_11 = arith.constant dense<0.000000e+00> : vector<128xf32>
    %13 = vector.multi_reduction <add>, %12, %cst_11 [0] : vector<32x128xf32> to vector<128xf32>
    %14 = vector.shape_cast %13 : vector<128xf32> to vector<1x128xf32>
    %15 = arith.addf %11, %14 : vector<1x128xf32>
    %c0_12 = arith.constant 0 : index
    %c0_13 = arith.constant 0 : index
    %16 = vector.load %arg5[%c0_12, %c0_13] : memref<8x128xf32, #tpu.memory_space<vmem>>, vector<1x128xf32>
    tpu.vector_store %arg5[%c0_12, %c0_13], %15 {strides = array<i32>} : memref<8x128xf32, #tpu.memory_space<vmem>>, vector<1x128xf32>,
    return
  }
  func.func @transform_0(%arg0: i32, %arg1: i32) -> (i32, i32) {
    %c2_i32 = arith.constant 2 : i32
    %0 = arith.muli %arg0, %c2_i32 : i32
    %1 = arith.addi %0, %arg1 : i32
    %c0_i32 = arith.constant 0 : i32
    %c0_i32_0 = arith.constant 0 : i32
    return %1, %c0_i32 : i32, i32
  }
  func.func @transform_1(%arg0: i32, %arg1: i32) -> (i32, i32) {
    %c0_i32 = arith.constant 0 : i32
    %c0_i32_0 = arith.constant 0 : i32
    %c0_i32_1 = arith.constant 0 : i32
    return %c0_i32, %c0_i32_0 : i32, i32
  }
  func.func @transform_2(%arg0: i32, %arg1: i32) -> (i32, i32) {
    %c0_i32 = arith.constant 0 : i32
    %c0_i32_0 = arith.constant 0 : i32
    return %arg0, %c0_i32 : i32, i32
  }
  func.func @transform_3(%arg0: i32, %arg1: i32) -> (i32, i32) {
    %c0_i32 = arith.constant 0 : i32
    %c0_i32_0 = arith.constant 0 : i32
    return %arg0, %c0_i32 : i32, i32
  }
}

</mosaic_0001>

<llo_original>
// kernel: tpu_custom_call.1
$region0: #{tpu_custom_call.1}
  #allocation0 [shape = 'u32[]', space=smem, size = 0x4, offset = 0x4, fixed_abs, tag = 'smem constant byte address 0x4 - core index']
  #allocation1 [shape = 'u32[144,128]{1,0:T(1,128)}', space=vmem, size = 0x12000, scoped, tag = 'internal scratch']
  %s0 = inlined_call_operand.vmem [shape: bf16[128,32], index: 0, kind: input, shape index: {}]
  %s1 = inlined_call_operand.vmem [shape: bf16[32,128], index: 1, kind: input, shape index: {}]
  %s2 = inlined_call_operand.hbm [shape: f32[16,128], index: 2, kind: output, shape index: {0}]
  %s3 = inlined_call_operand.hbm [shape: f32[16,128], index: 3, kind: output, shape index: {1}]
  %4 = xla_tuple %s2, %s3
  %s5 = sld [smem:[#allocation0]]
  $region53: #{tpu_custom_call.1} parent=0
    _
  %s7 = ssub.s32 1, %s5
  %s8 = scalar_select 0, %s7, %s5
  $region1: #{tpu_custom_call.1} parent=0
    #allocation2 [shape = 'u8[8192]{0}', space=vmem, size = 0x2000, scoped, tag = 'output window, operand 0']
    #allocation3 [shape = 's32[2]{0}', space=sflag, size = 0x8, scoped, tag = 'scoped memory for tpu_custom_call.1']
    #allocation4 [shape = 'u8[8192]{0}', space=vmem, size = 0x2000, scoped, tag = 'output window, operand 1']
    #allocation5 [shape = 's32[2]{0}', space=sflag, size = 0x8, scoped, tag = 'scoped memory for tpu_custom_call.1']
    %9 = vsyncpa [#allocation3], 0
    %s10 = scalar_lea.sflag [#allocation3], 1
    %11 = vsyncpa %s10, 0
    %12 = vsyncpa [#allocation5], 0
    %s13 = scalar_lea.sflag [#allocation5], 1
    %14 = vsyncpa %s13, 0
    loop: start=0, step=1, limit=6
    $region2: #{tpu_custom_call.1} parent=1 // loop_pre_header
      _
    $region3: #{tpu_custom_call.1} parent=1 // loop_header
      %s16 = sphi 0, %s20
      %p17 = scmp.ge.s32.totalorder %s16, 6
      %s23 = sphi 0, %s35
      %s24 = sphi 0, %s31
      %s25 = sphi 0, %s23
      %s26 = sphi 0, %s24
      %s27 = sphi 0, %s25
      %s28 = sphi 0, %s26
      %s42 = sphi 0, %s44
      %s45 = sphi 0, %s42
      %s46 = sphi 0, %s45
      %s62 = sphi 0, %s46
      %s66 = sphi 0, %s66
      %s68 = sphi 0, %s66
      %s69 = sphi 0, %s68
      %s83 = sphi 0, %s69
      %s89 = sphi 0, %s91
      %s92 = sphi 0, %s89
      %s93 = sphi 0, %s92
      %s109 = sphi 0, %s93
      %s115 = sphi 0, %s117
      %s118 = sphi 0, %s115
      %s119 = sphi 0, %s118
      %s135 = sphi 0, %s119
    $region4: #{tpu_custom_call.1} parent=1 // loop_header_branch
      %19 = sbr.rel (%p17) target = $region8
    $region5: #{tpu_custom_call.1} parent=1 // loop_body
      %s21 = ssub.s32 %s16, 1
      %s22 = ssub.s32 %s16, 2
      %s29 = sadd.s32 1, %s24
      %p30 = scmp.ge.s32.totalorder %s29, 2
      %s31 = scalar_select %p30, 0, %s29
      %s32 = sadd.s32 1, %s23
      %s33 = scalar_select %p30, %s32, %s23
      %p34 = scmp.ge.s32.totalorder %s33, 2
      %s35 = scalar_select %p34, 0, %s33
      %s36 = smul.u32 %s23, 2
      %s37 = sadd.s32 %s36, %s24
      %s38 = smul.u32 %s35, 2
      %s39 = sadd.s32 %s38, %s31
      %s40 = ssub.s32 %s37, %s39
      %p41 = scmp.eq.s32.totalorder %s40, 0
      %s43 = sadd.s32 %s42, 1
      %s44 = scalar_select %p41, %s42, %s43
      %p47 = pneg %p41
      %p48 = scmp.eq.s32.totalorder %s16, 3
      %p49 = por %p47, %p48
      %p50 = scmp.ne.s32.totalorder %s42, %s45
      %p51 = scmp.eq.s32.totalorder %s16, 0
      %p52 = por %p50, %p51
      %p53 = scmp.ne.s32.totalorder %s42, %s45
      %p54 = scmp.eq.s32.totalorder %s21, 3
      %p55 = por %p53, %p54
      %p56 = scmp.ne.s32.totalorder %s45, %s46
      %p57 = scmp.eq.s32.totalorder %s21, 0
      %p58 = por %p56, %p57
      %p59 = scmp.ne.s32.totalorder %s45, %s46
      %p60 = scmp.eq.s32.totalorder %s22, 3
      %p61 = por %p59, %p60
      %p63 = scmp.ne.s32.totalorder %s46, %s62
      %p64 = scmp.eq.s32.totalorder %s22, 0
      %p65 = por %p63, %p64
      %s67 = sadd.s32 %s66, 1
      %p70 = scmp.eq.s32.totalorder %s16, 3
      %p71 = scmp.ne.s32.totalorder %s66, %s68
      %p72 = scmp.eq.s32.totalorder %s16, 0
      %p73 = por %p71, %p72
      %p74 = scmp.ne.s32.totalorder %s66, %s68
      %p75 = scmp.eq.s32.totalorder %s21, 3
      %p76 = por %p74, %p75
      %p77 = scmp.ne.s32.totalorder %s68, %s69
      %p78 = scmp.eq.s32.totalorder %s21, 0
      %p79 = por %p77, %p78
      %p80 = scmp.ne.s32.totalorder %s68, %s69
      %p81 = scmp.eq.s32.totalorder %s22, 3
      %p82 = por %p80, %p81
      %p84 = scmp.ne.s32.totalorder %s69, %s83
      %p85 = scmp.eq.s32.totalorder %s22, 0
      %p86 = por %p84, %p85
      %s87 = ssub.s32 %s23, %s35
      %p88 = scmp.eq.s32.totalorder %s87, 0
      %s90 = sadd.s32 %s89, 1
      %s91 = scalar_select %p88, %s89, %s90
      %p94 = pneg %p88
      %p95 = scmp.eq.s32.totalorder %s16, 3
      %p96 = por %p94, %p95
      %p97 = scmp.ne.s32.totalorder %s89, %s92
      %p98 = scmp.eq.s32.totalorder %s16, 0
      %p99 = por %p97, %p98
      %p100 = scmp.ne.s32.totalorder %s89, %s92
      %p101 = scmp.eq.s32.totalorder %s21, 3
      %p102 = por %p100, %p101
      %p103 = scmp.ne.s32.totalorder %s92, %s93
      %p104 = scmp.eq.s32.totalorder %s21, 0
      %p105 = por %p103, %p104
      %p106 = scmp.ne.s32.totalorder %s92, %s93
      %p107 = scmp.eq.s32.totalorder %s22, 3
      %p108 = por %p106, %p107
      %p110 = scmp.ne.s32.totalorder %s93, %s109
      %p111 = scmp.eq.s32.totalorder %s22, 0
      %p112 = por %p110, %p111
      %s113 = ssub.s32 %s23, %s35
      %p114 = scmp.eq.s32.totalorder %s113, 0
      %s116 = sadd.s32 %s115, 1
      %s117 = scalar_select %p114, %s115, %s116
      %p120 = pneg %p114
      %p121 = scmp.eq.s32.totalorder %s16, 3
      %p122 = por %p120, %p121
      %p123 = scmp.ne.s32.totalorder %s115, %s118
      %p124 = scmp.eq.s32.totalorder %s16, 0
      %p125 = por %p123, %p124
      %p126 = scmp.ne.s32.totalorder %s115, %s118
      %p127 = scmp.eq.s32.totalorder %s21, 3
      %p128 = por %p126, %p127
      %p129 = scmp.ne.s32.totalorder %s118, %s119
      %p130 = scmp.eq.s32.totalorder %s21, 0
      %p131 = por %p129, %p130
      %p132 = scmp.ne.s32.totalorder %s118, %s119
      %p133 = scmp.eq.s32.totalorder %s22, 3
      %p134 = por %p132, %p133
      %p136 = scmp.ne.s32.totalorder %s119, %s135
      %p137 = scmp.eq.s32.totalorder %s22, 0
      %p138 = por %p136, %p137
      %p139 = scmp.le.s32.totalorder 1, %s16
      %p140 = scmp.lt.s32.totalorder %s16, 5
      %p141 = pnand %p139, %p140
      %p142 = pneg %p141
      // Predicated region
      $region9: #{tpu_custom_call.1} parent=5 // pred_check
        _
      $region10: #{tpu_custom_call.1} parent=5 // pred_check_branch
        %144 = sbr.rel (%p141) target = $region12
      $region11: #{tpu_custom_call.1} parent=5 // pred_region
        %s145 = ssub.s32 %s16, 1
        // Predicated region
        $region13: #{tpu_custom_call.1} parent=11 // pred_check
          %p146 = pneg %p79
        $region14: #{tpu_custom_call.1} parent=11 // pred_check_branch
          %148 = sbr.rel (%p146) target = $region16
        $region15: #{tpu_custom_call.1} parent=11 // pred_region
          _
        $region16: #{tpu_custom_call.1} parent=11 // pred_fallthru
          _
      $region12: #{tpu_custom_call.1} parent=5 // pred_fallthru
        _
      %p149 = scmp.lt.s32.totalorder %s16, 4
      // Predicated region
      $region17: #{tpu_custom_call.1} parent=5 // pred_check
        %p150 = pneg %p149
      $region18: #{tpu_custom_call.1} parent=5 // pred_check_branch
        %152 = sbr.rel (%p150) target = $region20
      $region19: #{tpu_custom_call.1} parent=5 // pred_region
        // Predicated region
        $region21: #{tpu_custom_call.1} parent=19 // pred_check
          %p153 = pneg %p52
        $region22: #{tpu_custom_call.1} parent=19 // pred_check_branch
          %155 = sbr.rel (%p153) target = $region24
        $region23: #{tpu_custom_call.1} parent=19 // pred_region
          %s156 = smul.u32 %s23, 2
          %s157 = sadd.s32 %s156, %s24
          %s158 = smul.u32 4, %s157
          %p159 = scmp.lt.s32.totalorder %s158, 15
          %s160 = scalar_select %p159, %s158, 15
          %s161 = smul.addr %s160, 4
          %s162 = scalar_lea.vmem %s0, %s161
          %s163 = smul.u32 %s23, 2
          %s164 = sadd.s32 %s163, %s24
          %s165 = smul.u32 4, %s164
        $region24: #{tpu_custom_call.1} parent=19 // pred_fallthru
          _
      $region20: #{tpu_custom_call.1} parent=5 // pred_fallthru
        _
      %p166 = scmp.le.s32.totalorder 1, %s16
      %p167 = scmp.lt.s32.totalorder %s16, 5
      %p168 = pnand %p166, %p167
      %p169 = pneg %p168
      // Predicated region
      $region25: #{tpu_custom_call.1} parent=5 // pred_check
        _
      $region26: #{tpu_custom_call.1} parent=5 // pred_check_branch
        %171 = sbr.rel (%p168) target = $region28
      $region27: #{tpu_custom_call.1} parent=5 // pred_region
        %s172 = ssub.s32 %s16, 1
        %s173 = smul.u32 %s25, 2
        %s174 = sadd.s32 %s173, %s26
        %s175 = smul.u32 4, %s174
        %p176 = scmp.lt.s32.totalorder %s175, 15
        %s177 = scalar_select %p176, %s175, 15
        %s178 = smul.addr %s177, 4
        %s179 = scalar_lea.vmem %s0, %s178
        %p180 = pneg %p58
        %p181 = pneg %p55
        %p182 = pneg %p79
        %p183 = pneg %p76
        %p184 = pneg %p105
        %p185 = pneg %p102
        %s186 = sand.u32 %s92, 1
        %s187 = scalar_lea.sflag [#allocation3], %s186
        %s188 = sand.u32 %s92, 1
        %s189 = smul.addr %s188, 8
        %s190 = scalar_lea.vmem [#allocation2], %s189
        %p191 = pneg %p131
        %p192 = pneg %p128
        %s193 = sand.u32 %s118, 1
        %s194 = scalar_lea.sflag [#allocation5], %s193
        %s195 = sand.u32 %s118, 1
        %s196 = smul.addr %s195, 8
        %s197 = scalar_lea.vmem [#allocation4], %s196
        %s198 = smul.u32 %s25, 2
        %s199 = sadd.s32 %s198, %s26
        %s200 = smul.u32 4, %s199
        %p201 = scmp.lt.s32.totalorder %s200, 15
        %s202 = scalar_select %p201, %s200, 15
        %s203 = smul.addr %s202, 4
        %s204 = scalar_lea.vmem %s0, %s203
        %s205 = smul.u32 %s25, 2
        %s206 = sadd.s32 %s205, %s26
        %s207 = smul.u32 4, %s206
        %p209 = scmp.eq.s32.totalorder %s26, 0
        // Predicated region
        $region29: #{tpu_custom_call.1} parent=27 // pred_check
          %p210 = pneg %p209
        $region30: #{tpu_custom_call.1} parent=27 // pred_check_branch
          %212 = sbr.rel (%p210) target = $region32
        $region31: #{tpu_custom_call.1} parent=27 // pred_region
          %213 = vst [vmem:[%s190] sm:$0xff] 0.0
          %214 = vst [vmem:[%s197] sm:$0xff] 0.0
        $region32: #{tpu_custom_call.1} parent=27 // pred_fallthru
          _
        %v215 = vld [vmem:[%s204] sm:$0xf]
        %v216 = vld [vmem:[%s204 + $0x4] sm:$0xf]
        %v217 = vld [vmem:[%s204 + $0x8] sm:$0xf]
        %v218 = vld [vmem:[%s204 + $0xc] sm:$0xf]
        %v219 = vld [vmem:[%s1] sm:$0xf]
        %v220 = vld [vmem:[%s1 + $0x4] sm:$0xf]
        %v221 = vld [vmem:[%s1 + $0x8] sm:$0xf]
        %v222 = vld [vmem:[%s1 + $0xc] sm:$0xf]
        %v227 = vunpack.c.l.b16 %v215
        %v228 = vunpack.c.l.b16 %v216
        %v229 = vunpack.c.l.b16 %v217
        %v230 = vunpack.c.l.b16 %v218
        %v231 = vpack.c.b16 %v228, %v227
        %v232 = vpack.c.b16 %v230, %v229
        %v237 = vunpack.c.l.b16 %v219
        %v238 = vunpack.c.l.b16 %v220
        %v239 = vunpack.c.l.b16 %v221
        %v240 = vunpack.c.l.b16 %v222
        %v241 = vpack.c.b16 %v238, %v237
        %v242 = vpack.c.b16 %v240, %v239
        %vm245 = vcmask 261120
        %v247 = vsel %vm245, %v231, 0
        %v250 = vsel %vm245, %v232, 0
        %252 = vmatprep.subr.bf16.mxu0 0
        %253 = vmatpush1.bf16.msra.mxu0 %v241
        %254 = vmatprep.subr.bf16.mxu0 0
        %255 = vmatpush1.bf16.msra.mxu0 %v242
        %256 = vmatprep.subr.bf16.mxu0 0
        %257 = vmatpush1.bf16.msra.mxu0 0
        %258 = vmatprep.subr.bf16.mxu0 0
        %259 = vmatpush1.bf16.msra.mxu0 0
        %260 = vmatprep.subr.bf16.mxu0 0
        %261 = vmatpush1.bf16.msra.mxu0 0
        %262 = vmatprep.subr.bf16.mxu0 0
        %263 = vmatpush1.bf16.msra.mxu0 0
        %264 = vmatprep.subr.bf16.mxu0 0
        %265 = vmatpush1.bf16.msra.mxu0 0
        %266 = vmatprep.subr.bf16.mxu0 0
        %267 = vmatpush1.bf16.msra.mxu0 0
        %268 = vmatprep.subr.bf16.mxu0 0
        %269 = vmatpush1.bf16.msra.mxu0 0
        %270 = vmatprep.subr.bf16.mxu0 0
        %271 = vmatpush1.bf16.msra.mxu0 0
        %272 = vmatprep.subr.bf16.mxu0 0
        %273 = vmatpush1.bf16.msra.mxu0 0
        %274 = vmatprep.subr.bf16.mxu0 0
        %275 = vmatpush1.bf16.msra.mxu0 0
        %276 = vmatprep.subr.bf16.mxu0 0
        %277 = vmatpush1.bf16.msra.mxu0 0
        %278 = vmatprep.subr.bf16.mxu0 0
        %279 = vmatpush1.bf16.msra.mxu0 0
        %280 = vmatprep.subr.bf16.mxu0 0
        %281 = vmatpush1.bf16.msra.mxu0 0
        %282 = vmatprep.subr.bf16.mxu0 0
        %283 = vmatpush1.bf16.msra.mxu0 0
        %284 = vmatprep.mubr.bf16.mxu0 0
        %285 = vmatmul.mubr.bf16.gmra.mrb[0].mxu0 %v247
        %v286 = vpop.f32.mrb[0].mxu0
        %v287 = vadd.f32 0.0, %v286
        %v288 = vpop.f32.mrb[0].mxu0
        %v289 = vpop.f32.mrb[0].mxu0
        %v290 = vadd.f32 0.0, %v289
        %v291 = vpop.f32.mrb[0].mxu0
        %292 = vmatprep.mubr.bf16.mxu0 0
        %293 = vmatmul.mubr.bf16.gmra.mrb[0].mxu0 %v250
        %v294 = vpop.f32.mrb[0].mxu0
        %v295 = vadd.f32 0.0, %v294
        %v296 = vpop.f32.mrb[0].mxu0
        %v297 = vpop.f32.mrb[0].mxu0
        %v298 = vadd.f32 0.0, %v297
        %v299 = vpop.f32.mrb[0].mxu0
        %300 = vdwg.mxu0
        %v301 = vld [vmem:[%s190] sm:$0x1]
        %v302 = vadd.f32 %v287, %v290
        %v303 = vadd.f32 %v302, %v295
        %v304 = vadd.f32 %v303, %v298
        %v305 = vrot.slane %v304, 4
        %v306 = vadd.f32 %v304, %v305
        %v307 = vrot.slane %v306, 2
        %v308 = vadd.f32 %v306, %v307
        %v309 = vrot.slane %v308, 1
        %v310 = vadd.f32 %v308, %v309
        %v311 = vadd.f32 %v301, %v310
        %312 = vst [vmem:[%s190] sm:$0x1] %v311
        %v313 = vld [vmem:[%s197] sm:$0x1]
        %v314 = vmul.f32 %v287, %v287
        %v315 = vmul.f32 %v290, %v290
        %v316 = vmul.f32 %v295, %v295
        %v317 = vmul.f32 %v298, %v298
        %v318 = vadd.f32 %v314, %v315
        %v319 = vadd.f32 %v318, %v316
        %v320 = vadd.f32 %v319, %v317
        %v321 = vrot.slane %v320, 4
        %v322 = vadd.f32 %v320, %v321
        %v323 = vrot.slane %v322, 2
        %v324 = vadd.f32 %v322, %v323
        %v325 = vrot.slane %v324, 1
        %v326 = vadd.f32 %v324, %v325
        %v327 = vadd.f32 %v313, %v326
        %328 = vst [vmem:[%s197] sm:$0x1] %v327
        %s329 = sand.u32 %s92, 1
        %s330 = scalar_lea.sflag [#allocation3], %s329
        %s331 = sand.u32 %s92, 1
        %s332 = smul.addr %s331, 8
        %s333 = scalar_lea.vmem [#allocation2], %s332
        %s334 = sand.u32 %s118, 1
        %s335 = scalar_lea.sflag [#allocation5], %s334
        %s336 = sand.u32 %s118, 1
        %s337 = smul.addr %s336, 8
        %s338 = scalar_lea.vmem [#allocation4], %s337
        // Predicated region
        $region33: #{tpu_custom_call.1} parent=27 // pred_check
          %p339 = pneg %p102
        $region34: #{tpu_custom_call.1} parent=27 // pred_check_branch
          %341 = sbr.rel (%p339) target = $region36
        $region35: #{tpu_custom_call.1} parent=27 // pred_region
          %s343 = ssub.s32 128, 128
          %344 = vsyncadd %s330, %s343
          %s345 = smul.addr %s25, 128
          %s346 = scalar_lea.hbm %s2, %s345
          %s348 = sshll.u32 %s333, 4
          %s349 = int_to_ptr.vmem [resolvable:$true] %s348
          %351 = dma.vmem_to_hbm [thread:$0]  %s349, 128, %s346, %s330
        $region36: #{tpu_custom_call.1} parent=27 // pred_fallthru
          _
        // Predicated region
        $region37: #{tpu_custom_call.1} parent=27 // pred_check
          %p352 = pneg %p128
        $region38: #{tpu_custom_call.1} parent=27 // pred_check_branch
          %354 = sbr.rel (%p352) target = $region40
        $region39: #{tpu_custom_call.1} parent=27 // pred_region
          %s356 = ssub.s32 128, 128
          %357 = vsyncadd %s335, %s356
          %s358 = smul.addr %s25, 128
          %s359 = scalar_lea.hbm %s3, %s358
          %s361 = sshll.u32 %s338, 4
          %s362 = int_to_ptr.vmem [resolvable:$true] %s361
          %364 = dma.vmem_to_hbm [thread:$0]  %s362, 128, %s359, %s335
        $region40: #{tpu_custom_call.1} parent=27 // pred_fallthru
          _
      $region28: #{tpu_custom_call.1} parent=5 // pred_fallthru
        _
      %p365 = scmp.le.s32.totalorder 2, %s16
      // Predicated region
      $region41: #{tpu_custom_call.1} parent=5 // pred_check
        %p366 = pneg %p365
      $region42: #{tpu_custom_call.1} parent=5 // pred_check_branch
        %368 = sbr.rel (%p366) target = $region44
      $region43: #{tpu_custom_call.1} parent=5 // pred_region
        %s369 = ssub.s32 %s16, 2
        // Predicated region
        $region45: #{tpu_custom_call.1} parent=43 // pred_check
          %p370 = pneg %p108
        $region46: #{tpu_custom_call.1} parent=43 // pred_check_branch
          %372 = sbr.rel (%p370) target = $region48
        $region47: #{tpu_custom_call.1} parent=43 // pred_region
          %s373 = sand.u32 %s93, 1
          %s374 = scalar_lea.sflag [#allocation3], %s373
          %s375 = sand.u32 %s93, 1
          %s376 = smul.addr %s375, 8
          %s377 = scalar_lea.vmem [#allocation2], %s376
          %378 = dma.done %s374, 128
        $region48: #{tpu_custom_call.1} parent=43 // pred_fallthru
          _
        // Predicated region
        $region49: #{tpu_custom_call.1} parent=43 // pred_check
          %p379 = pneg %p134
        $region50: #{tpu_custom_call.1} parent=43 // pred_check_branch
          %381 = sbr.rel (%p379) target = $region52
        $region51: #{tpu_custom_call.1} parent=43 // pred_region
          %s382 = sand.u32 %s119, 1
          %s383 = scalar_lea.sflag [#allocation5], %s382
          %s384 = sand.u32 %s119, 1
          %s385 = smul.addr %s384, 8
          %s386 = scalar_lea.vmem [#allocation4], %s385
          %387 = dma.done %s383, 128
        $region52: #{tpu_custom_call.1} parent=43 // pred_fallthru
          _
      $region44: #{tpu_custom_call.1} parent=5 // pred_fallthru
        _
    $region6: #{tpu_custom_call.1} parent=1 // loop_footer
      %s20 = sadd.s32 1, %s16
    $region7: #{tpu_custom_call.1} parent=1 // loop_footer_branch
      %15 = sbr.rel target = $region3
    $region8: #{tpu_custom_call.1} parent=1 // loop_exit
      _
    %388 = vsyncpa [#allocation3], 1
    %s389 = scalar_lea.sflag [#allocation3], 1
    %390 = vsyncpa %s389, 1
    %391 = vsyncpa [#allocation5], 1
    %s392 = scalar_lea.sflag [#allocation5], 1
    %393 = vsyncpa %s392, 1

</llo_original>
